<compile_context>
chip_gen: v7x
topology: tpu7x:2x2x1
jax: 0.10.0
libtpu: 0.0.40
codegen_flags: <defaults>
</compile_context>

<pallas_src>
import jax
import jax.numpy as jnp
from jax.experimental import pallas as pl
from jax.experimental.pallas import tpu as pltpu

HIDDEN = 64
_MIN_PALLAS_BATCH = 64       # below this, XLA's fused dot beats kernel launch cost
_DEFAULT_MAX_TILE = 4096     # sweep-derived default tile cap (2048-8192 sweet spot)


def _mlp_kernel(x_ref, w1_ref, b1_ref, w2_ref, b2_ref, w3_ref, b3_ref, o_ref):
    # x arrives as f32 straight from HBM; cast to the MXU compute dtype in
    # VMEM (cheap VPU op) instead of paying a wrapper-side HBM round-trip.
    x = x_ref[...].astype(w1_ref.dtype)
    # Layer 1: x @ W1 + b1, ReLU   (bf16 MXU inputs, f32 accumulation)
    h1 = jnp.dot(x, w1_ref[...], preferred_element_type=jnp.float32)
    h1 = jnp.maximum(h1 + b1_ref[...], 0.0)
    # (dropout = identity at inference)
    # Layer 2: h1 @ W2 + b2, ReLU
    h1 = h1.astype(w2_ref.dtype)
    h2 = jnp.dot(h1, w2_ref[...], preferred_element_type=jnp.float32)
    h2 = jnp.maximum(h2 + b2_ref[...], 0.0)
    # (dropout = identity at inference)
    # Layer 3: h2 @ W3 + b3
    h2 = h2.astype(w3_ref.dtype)
    out = jnp.dot(h2, w3_ref[...], preferred_element_type=jnp.float32)
    o_ref[...] = (out + b3_ref[...]).astype(o_ref.dtype)


def _round_up(n, m):
    return ((n + m - 1) // m) * m


def _vmem_capacity_bytes():
    try:
        return int(pltpu.get_tpu_info().vmem_capacity_bytes)
    except Exception:
        return 64 * 1024 * 1024   # conservative: v7x per-TensorCore VMEM


def _tile_row_bytes(in_dim, out_dim):
    """Approximate VMEM bytes needed per batch row of one tile."""
    db = 2                                   # double-buffered I/O streams
    x_stream = db * 4 * in_dim               # f32 x tile, pipelined
    o_stream = db * 4 * out_dim              # f32 out tile, pipelined
    interm = 2 * in_dim                      # bf16 copy of x
    interm += HIDDEN * (4 + 2) * 2           # h1, h2 in f32 + bf16
    interm += 4 * out_dim                    # pre-store f32 result
    return x_stream + o_stream + interm


def _max_tile_rows(in_dim, out_dim, vmem_budget):
    rows = vmem_budget // _tile_row_bytes(in_dim, out_dim)
    rows = (rows // 16) * 16
    return max(rows, 16)


def _pick_batch_tile(batch, cap_rows):
    """Default batch tile.

    >=4 grid steps for mid-size batches (>=2 per v7x TensorCore keeps the
    BlockSpec pipeline double-buffering on both cores), bounded above by the
    sweep-derived default (4096 rows) and the per-generation VMEM row cap.
    """
    tb = _round_up(pl.cdiv(batch, 4), 16)
    tb = min(tb, _DEFAULT_MAX_TILE, cap_rows)
    return max(tb, 16)


def regressor_g_forward(x, params, *, batch_tile=None, force_pallas=False,
                        compute_dtype=jnp.bfloat16):
    """Fused forward pass of Regressor_g.

    x:      [B, input_dim] float32
    params: dict with w1 [in,64], b1 [1,64], w2 [64,64], b2 [1,64],
            w3 [64,out], b3 [1,out]  (weights already transposed relative to
            torch.nn.Linear.weight, so y = x @ W + b).
    """
    B, in_dim = x.shape
    out_dim = params["w3"].shape[1]

    # Tiny-batch fallback: kernel launch overhead dominates; XLA fused dot wins.
    if B < _MIN_PALLAS_BATCH and not force_pallas:
        return reference_forward(x, params)

    vmem_cap = _vmem_capacity_bytes()
    # Scoped limit: ~3/4 of physical VMEM capped at 64 MiB (64 MiB on v5e/v6e,
    # 48 MiB on v7x); tile sizing uses half of that as headroom for compiler
    # scratch and DMA descriptors.
    vmem_limit = int(min(vmem_cap * 3 // 4, 64 * 1024 * 1024))
    cap_rows = _max_tile_rows(in_dim, out_dim, vmem_limit // 2)

    if batch_tile is None:
        tb = _pick_batch_tile(B, cap_rows)
    else:
        # Guard user-supplied tiles: multiple of 16, within the VMEM row cap.
        tb = max(16, min(_round_up(int(batch_tile), 16), cap_rows))

    grid_n = pl.cdiv(B, tb)

    # Weights/biases are tiny and stay VMEM-resident across all grid steps
    # (constant index_maps); cast them once in the wrapper.
    w1 = params["w1"].astype(compute_dtype)
    w2 = params["w2"].astype(compute_dtype)
    w3 = params["w3"].astype(compute_dtype)
    b1 = params["b1"].astype(jnp.float32)
    b2 = params["b2"].astype(jnp.float32)
    b3 = params["b3"].astype(jnp.float32)

    in_specs = [
        # x tiled over the batch axis (read as f32; cast to bf16 in-kernel).
        pl.BlockSpec((tb, in_dim), lambda i: (i, 0)),
        pl.BlockSpec((in_dim, HIDDEN), lambda i: (0, 0)),
        pl.BlockSpec((1, HIDDEN), lambda i: (0, 0)),
        pl.BlockSpec((HIDDEN, HIDDEN), lambda i: (0, 0)),
        pl.BlockSpec((1, HIDDEN), lambda i: (0, 0)),
        pl.BlockSpec((HIDDEN, out_dim), lambda i: (0, 0)),
        pl.BlockSpec((1, out_dim), lambda i: (0, 0)),
    ]
    out_specs = pl.BlockSpec((tb, out_dim), lambda i: (i, 0))

    # Note: grid_n * tb may exceed B (ragged batch).  The final partial block
    # is handled by Pallas edge padding: OOB rows read unspecified data and
    # their writes are dropped; the MLP is row-wise so this is harmless.
    return pl.pallas_call(
        _mlp_kernel,
        out_shape=jax.ShapeDtypeStruct((B, out_dim), jnp.float32),
        grid_spec=pl.GridSpec(
            grid=(grid_n,),
            in_specs=in_specs,
            out_specs=out_specs,
        ),
        compiler_params=pltpu.CompilerParams(
            dimension_semantics=("parallel",),
            vmem_limit_bytes=vmem_limit,
        ),
    )(x.astype(jnp.float32), w1, b1, w2, b2, w3, b3)


def init_params(key, input_dim, output_dim):
    """Deterministic parameter init (uniform, PyTorch-Linear-style bounds).

    Weights stored as [in_features, out_features] (i.e. already transposed
    relative to torch.nn.Linear.weight)."""
    ks = jax.random.split(key, 6)

    def lin(kw, kb, fan_in, fan_out):
        bound = 1.0 / jnp.sqrt(fan_in)
        w = jax.random.uniform(kw, (fan_in, fan_out), jnp.float32, -bound, bound)
        b = jax.random.uniform(kb, (1, fan_out), jnp.float32, -bound, bound)
        return w, b

    w1, b1 = lin(ks[0], ks[1], input_dim, HIDDEN)
    w2, b2 = lin(ks[2], ks[3], HIDDEN, HIDDEN)
    w3, b3 = lin(ks[4], ks[5], HIDDEN, output_dim)
    return dict(w1=w1, b1=b1, w2=w2, b2=b2, w3=w3, b3=b3)


def reference_forward(x, p):
    h1 = jnp.maximum(x @ p["w1"] + p["b1"], 0.0)
    h2 = jnp.maximum(h1 @ p["w2"] + p["b2"], 0.0)
    return h2 @ p["w3"] + p["b3"]


if __name__ == "__main__":
    key = jax.random.PRNGKey(0)
    k_x, k_p, k_x2 = jax.random.split(key, 3)

    input_dim = 32
    output_dim = 8
    params = init_params(k_p, input_dim, output_dim)

    # --- main check: Pallas path with >=4 grid steps (tb=64 here).
    batch = 256
    x = jax.random.normal(k_x, (batch, input_dim), jnp.float32)
    out = jax.block_until_ready(regressor_g_forward(x, params))
    ref = reference_forward(x, params)
    assert out.shape == (batch, output_dim)
    # bf16 MXU inputs + f32 accumulation -> relaxed tolerance vs f32 reference
    assert jnp.allclose(out, ref, atol=5e-2, rtol=5e-2), "mismatch vs reference"

    # --- ragged check: B not a multiple of the tile (padded edge-block path).
    batch2 = 70
    x2 = jax.random.normal(k_x2, (batch2, input_dim), jnp.float32)
    out2 = jax.block_until_ready(
        regressor_g_forward(x2, params, force_pallas=True))
    ref2 = reference_forward(x2, params)
    assert out2.shape == (batch2, output_dim)
    assert jnp.allclose(out2, ref2, atol=5e-2, rtol=5e-2), "ragged-tail mismatch"

    print("KERNEL_OK")
</pallas_src>

<mosaic_0001>
module attributes {stable_mosaic.version = 11 : i64} {
  func.func @_mlp_kernel(%arg0: i32, %arg1: memref<64x32xf32, #tpu.memory_space<vmem>>, %arg2: memref<32x64xbf16, #tpu.memory_space<vmem>>, %arg3: memref<1x64xf32, #tpu.memory_space<vmem>>, %arg4: memref<64x64xbf16, #tpu.memory_space<vmem>>, %arg5: memref<1x64xf32, #tpu.memory_space<vmem>>, %arg6: memref<64x8xbf16, #tpu.memory_space<vmem>>, %arg7: memref<1x8xf32, #tpu.memory_space<vmem>>, %arg8: memref<64x8xf32, #tpu.memory_space<vmem>>) attributes {dimension_semantics = [#tpu.dimension_semantics<parallel>], iteration_bounds = array<i64: 4>, scalar_prefetch = 0 : i64, scratch_operands = 0 : i64, tpu.core_type = #tpu.core_type<tc>, window_params = [{transform_indices = @transform_0, window_bounds = array<i64: 64, 32>}, {pipeline_mode = #tpu.pipeline_mode<synchronous>, transform_indices = @transform_1, window_bounds = array<i64: 32, 64>}, {pipeline_mode = #tpu.pipeline_mode<synchronous>, transform_indices = @transform_2, window_bounds = array<i64: 1, 64>}, {pipeline_mode = #tpu.pipeline_mode<synchronous>, transform_indices = @transform_3, window_bounds = array<i64: 64, 64>}, {pipeline_mode = #tpu.pipeline_mode<synchronous>, transform_indices = @transform_4, window_bounds = array<i64: 1, 64>}, {pipeline_mode = #tpu.pipeline_mode<synchronous>, transform_indices = @transform_5, window_bounds = array<i64: 64, 8>}, {pipeline_mode = #tpu.pipeline_mode<synchronous>, transform_indices = @transform_6, window_bounds = array<i64: 1, 8>}, {transform_indices = @transform_7, window_bounds = array<i64: 64, 8>}]} {
    %c0 = arith.constant 0 : index
    %c0_0 = arith.constant 0 : index
    %0 = vector.load %arg1[%c0, %c0_0] : memref<64x32xf32, #tpu.memory_space<vmem>>, vector<64x32xf32>
    %1 = arith.truncf %0 : vector<64x32xf32> to vector<64x32xbf16>
    %c0_1 = arith.constant 0 : index
    %c0_2 = arith.constant 0 : index
    %2 = vector.load %arg2[%c0_1, %c0_2] : memref<32x64xbf16, #tpu.memory_space<vmem>>, vector<32x64xbf16>
    %cst = arith.constant dense<0.000000e+00> : vector<64x64xf32>
    %3 = tpu.matmul %1, %2, %cst {dimension_numbers = #tpu.dot_dimension_numbers<[1], [0], [0], [1], [0, 0, 1, 1], [], []>} : vector<64x32xbf16>, vector<32x64xbf16>, vector<64x64xf32> -> vector<64x64xf32>
    %c0_3 = arith.constant 0 : index
    %c0_4 = arith.constant 0 : index
    %4 = vector.load %arg3[%c0_3, %c0_4] : memref<1x64xf32, #tpu.memory_space<vmem>>, vector<1x64xf32>
    %5 = vector.broadcast %4 : vector<1x64xf32> to vector<64x64xf32>
    %6 = arith.addf %3, %5 : vector<64x64xf32>
    %cst_5 = arith.constant 0.000000e+00 : f32
    %7 = vector.broadcast %cst_5 : f32 to vector<64x64xf32>
    %8 = arith.maximumf %6, %7 : vector<64x64xf32>
    %9 = arith.truncf %8 : vector<64x64xf32> to vector<64x64xbf16>
    %c0_6 = arith.constant 0 : index
    %c0_7 = arith.constant 0 : index
    %10 = vector.load %arg4[%c0_6, %c0_7] : memref<64x64xbf16, #tpu.memory_space<vmem>>, vector<64x64xbf16>
    %cst_8 = arith.constant dense<0.000000e+00> : vector<64x64xf32>
    %11 = tpu.matmul %9, %10, %cst_8 {dimension_numbers = #tpu.dot_dimension_numbers<[1], [0], [0], [1], [0, 0, 1, 1], [], []>} : vector<64x64xbf16>, vector<64x64xbf16>, vector<64x64xf32> -> vector<64x64xf32>
    %c0_9 = arith.constant 0 : index
    %c0_10 = arith.constant 0 : index
    %12 = vector.load %arg5[%c0_9, %c0_10] : memref<1x64xf32, #tpu.memory_space<vmem>>, vector<1x64xf32>
    %13 = vector.broadcast %12 : vector<1x64xf32> to vector<64x64xf32>
    %14 = arith.addf %11, %13 : vector<64x64xf32>
    %cst_11 = arith.constant 0.000000e+00 : f32
    %15 = vector.broadcast %cst_11 : f32 to vector<64x64xf32>
    %16 = arith.maximumf %14, %15 : vector<64x64xf32>
    %17 = arith.truncf %16 : vector<64x64xf32> to vector<64x64xbf16>
    %c0_12 = arith.constant 0 : index
    %c0_13 = arith.constant 0 : index
    %18 = vector.load %arg6[%c0_12, %c0_13] : memref<64x8xbf16, #tpu.memory_space<vmem>>, vector<64x8xbf16>
    %cst_14 = arith.constant dense<0.000000e+00> : vector<64x8xf32>
    %19 = tpu.matmul %17, %18, %cst_14 {dimension_numbers = #tpu.dot_dimension_numbers<[1], [0], [0], [1], [0, 0, 1, 1], [], []>} : vector<64x64xbf16>, vector<64x8xbf16>, vector<64x8xf32> -> vector<64x8xf32>
    %c0_15 = arith.constant 0 : index
    %c0_16 = arith.constant 0 : index
    %20 = vector.load %arg7[%c0_15, %c0_16] : memref<1x8xf32, #tpu.memory_space<vmem>>, vector<1x8xf32>
    %21 = vector.broadcast %20 : vector<1x8xf32> to vector<64x8xf32>
    %22 = arith.addf %19, %21 : vector<64x8xf32>
    %c0_17 = arith.constant 0 : index
    %c0_18 = arith.constant 0 : index
    %23 = vector.load %arg8[%c0_17, %c0_18] : memref<64x8xf32, #tpu.memory_space<vmem>>, vector<64x8xf32>
    tpu.vector_store %arg8[%c0_17, %c0_18], %22 {strides = array<i32>} : memref<64x8xf32, #tpu.memory_space<vmem>>, vector<64x8xf32>,
    return
  }
  func.func @transform_0(%arg0: i32) -> (i32, i32) {
    %c0_i32 = arith.constant 0 : i32
    %c0_i32_0 = arith.constant 0 : i32
    return %arg0, %c0_i32 : i32, i32
  }
  func.func @transform_1(%arg0: i32) -> (i32, i32) {
    %c0_i32 = arith.constant 0 : i32
    %c0_i32_0 = arith.constant 0 : i32
    %c0_i32_1 = arith.constant 0 : i32
    return %c0_i32, %c0_i32_0 : i32, i32
  }
  func.func @transform_2(%arg0: i32) -> (i32, i32) {
    %c0_i32 = arith.constant 0 : i32
    %c0_i32_0 = arith.constant 0 : i32
    %c0_i32_1 = arith.constant 0 : i32
    return %c0_i32, %c0_i32_0 : i32, i32
  }
  func.func @transform_3(%arg0: i32) -> (i32, i32) {
    %c0_i32 = arith.constant 0 : i32
    %c0_i32_0 = arith.constant 0 : i32
    %c0_i32_1 = arith.constant 0 : i32
    return %c0_i32, %c0_i32_0 : i32, i32
  }
  func.func @transform_4(%arg0: i32) -> (i32, i32) {
    %c0_i32 = arith.constant 0 : i32
    %c0_i32_0 = arith.constant 0 : i32
    %c0_i32_1 = arith.constant 0 : i32
    return %c0_i32, %c0_i32_0 : i32, i32
  }
  func.func @transform_5(%arg0: i32) -> (i32, i32) {
    %c0_i32 = arith.constant 0 : i32
    %c0_i32_0 = arith.constant 0 : i32
    %c0_i32_1 = arith.constant 0 : i32
    return %c0_i32, %c0_i32_0 : i32, i32
  }
  func.func @transform_6(%arg0: i32) -> (i32, i32) {
    %c0_i32 = arith.constant 0 : i32
    %c0_i32_0 = arith.constant 0 : i32
    %c0_i32_1 = arith.constant 0 : i32
    return %c0_i32, %c0_i32_0 : i32, i32
  }
  func.func @transform_7(%arg0: i32) -> (i32, i32) {
    %c0_i32 = arith.constant 0 : i32
    %c0_i32_0 = arith.constant 0 : i32
    return %arg0, %c0_i32 : i32, i32
  }
}

</mosaic_0001>

<llo_original>
// kernel: tpu_custom_call.1
$region0: #{tpu_custom_call.1}
  #allocation0 [shape = 'u32[]', space=smem, size = 0x4, offset = 0x4, fixed_abs, tag = 'smem constant byte address 0x4 - core index']
  #allocation1 [shape = 'u32[144,128]{1,0:T(1,128)}', space=vmem, size = 0x12000, scoped, tag = 'internal scratch']
  %s0 = inlined_call_operand.vmem [shape: f32[256,32], index: 0, kind: input, shape index: {}]
  %s1 = inlined_call_operand.vmem [shape: bf16[32,64], index: 1, kind: input, shape index: {}]
  %s2 = inlined_call_operand.vmem [shape: f32[1,64], index: 2, kind: input, shape index: {}]
  %s3 = inlined_call_operand.vmem [shape: bf16[64,64], index: 3, kind: input, shape index: {}]
  %s4 = inlined_call_operand.vmem [shape: f32[1,64], index: 4, kind: input, shape index: {}]
  %s5 = inlined_call_operand.vmem [shape: bf16[64,8], index: 5, kind: input, shape index: {}]
  %s6 = inlined_call_operand.vmem [shape: f32[1,8], index: 6, kind: input, shape index: {}]
  %s7 = inlined_call_operand.vmem [shape: f32[256,8], index: 7, kind: output, shape index: {}]
  %s8 = sld [smem:[#allocation0]]
  $region61: #{tpu_custom_call.1} parent=0
    _
  %s10 = ssub.s32 1, %s8
  %s11 = scalar_select 0, %s10, %s8
  loop: start=0, step=1, limit=6
  $region2: #{tpu_custom_call.1} parent=0 // loop_pre_header
    _
  $region3: #{tpu_custom_call.1} parent=0 // loop_header
    %s13 = sphi 0, %s17
    %p14 = scmp.ge.s32.totalorder %s13, 6
    %s23 = sphi 0, %s25
    %s26 = sphi 0, %s23
    %s27 = sphi 0, %s26
    %s43 = sphi 0, %s27
    %s47 = sphi 0, %s47
    %s49 = sphi 0, %s47
    %s50 = sphi 0, %s49
    %s64 = sphi 0, %s50
    %s68 = sphi 0, %s68
    %s70 = sphi 0, %s68
    %s71 = sphi 0, %s70
    %s85 = sphi 0, %s71
    %s89 = sphi 0, %s89
    %s91 = sphi 0, %s89
    %s92 = sphi 0, %s91
    %s106 = sphi 0, %s92
    %s110 = sphi 0, %s110
    %s112 = sphi 0, %s110
    %s113 = sphi 0, %s112
    %s127 = sphi 0, %s113
    %s131 = sphi 0, %s131
    %s133 = sphi 0, %s131
    %s134 = sphi 0, %s133
    %s148 = sphi 0, %s134
    %s152 = sphi 0, %s152
    %s154 = sphi 0, %s152
    %s155 = sphi 0, %s154
    %s169 = sphi 0, %s155
    %s175 = sphi 0, %s177
    %s178 = sphi 0, %s175
    %s179 = sphi 0, %s178
    %s195 = sphi 0, %s179
  $region4: #{tpu_custom_call.1} parent=0 // loop_header_branch
    %16 = sbr.rel (%p14) target = $region8
  $region5: #{tpu_custom_call.1} parent=0 // loop_body
    %s18 = ssub.s32 %s13, 1
    %s19 = ssub.s32 %s13, 2
    %s20 = sadd.s32 %s13, 1
    %s21 = ssub.s32 %s13, %s20
    %p22 = scmp.eq.s32.totalorder %s21, 0
    %s24 = sadd.s32 %s23, 1
    %s25 = scalar_select %p22, %s23, %s24
    %p28 = pneg %p22
    %p29 = scmp.eq.s32.totalorder %s13, 3
    %p30 = por %p28, %p29
    %p31 = scmp.ne.s32.totalorder %s23, %s26
    %p32 = scmp.eq.s32.totalorder %s13, 0
    %p33 = por %p31, %p32
    %p34 = scmp.ne.s32.totalorder %s23, %s26
    %p35 = scmp.eq.s32.totalorder %s18, 3
    %p36 = por %p34, %p35
    %p37 = scmp.ne.s32.totalorder %s26, %s27
    %p38 = scmp.eq.s32.totalorder %s18, 0
    %p39 = por %p37, %p38
    %p40 = scmp.ne.s32.totalorder %s26, %s27
    %p41 = scmp.eq.s32.totalorder %s19, 3
    %p42 = por %p40, %p41
    %p44 = scmp.ne.s32.totalorder %s27, %s43
    %p45 = scmp.eq.s32.totalorder %s19, 0
    %p46 = por %p44, %p45
    %s48 = sadd.s32 %s47, 1
    %p51 = scmp.eq.s32.totalorder %s13, 3
    %p52 = scmp.ne.s32.totalorder %s47, %s49
    %p53 = scmp.eq.s32.totalorder %s13, 0
    %p54 = por %p52, %p53
    %p55 = scmp.ne.s32.totalorder %s47, %s49
    %p56 = scmp.eq.s32.totalorder %s18, 3
    %p57 = por %p55, %p56
    %p58 = scmp.ne.s32.totalorder %s49, %s50
    %p59 = scmp.eq.s32.totalorder %s18, 0
    %p60 = por %p58, %p59
    %p61 = scmp.ne.s32.totalorder %s49, %s50
    %p62 = scmp.eq.s32.totalorder %s19, 3
    %p63 = por %p61, %p62
    %p65 = scmp.ne.s32.totalorder %s50, %s64
    %p66 = scmp.eq.s32.totalorder %s19, 0
    %p67 = por %p65, %p66
    %s69 = sadd.s32 %s68, 1
    %p72 = scmp.eq.s32.totalorder %s13, 3
    %p73 = scmp.ne.s32.totalorder %s68, %s70
    %p74 = scmp.eq.s32.totalorder %s13, 0
    %p75 = por %p73, %p74
    %p76 = scmp.ne.s32.totalorder %s68, %s70
    %p77 = scmp.eq.s32.totalorder %s18, 3
    %p78 = por %p76, %p77
    %p79 = scmp.ne.s32.totalorder %s70, %s71
    %p80 = scmp.eq.s32.totalorder %s18, 0
    %p81 = por %p79, %p80
    %p82 = scmp.ne.s32.totalorder %s70, %s71
    %p83 = scmp.eq.s32.totalorder %s19, 3
    %p84 = por %p82, %p83
    %p86 = scmp.ne.s32.totalorder %s71, %s85
    %p87 = scmp.eq.s32.totalorder %s19, 0
    %p88 = por %p86, %p87
    %s90 = sadd.s32 %s89, 1
    %p93 = scmp.eq.s32.totalorder %s13, 3
    %p94 = scmp.ne.s32.totalorder %s89, %s91
    %p95 = scmp.eq.s32.totalorder %s13, 0
    %p96 = por %p94, %p95
    %p97 = scmp.ne.s32.totalorder %s89, %s91
    %p98 = scmp.eq.s32.totalorder %s18, 3
    %p99 = por %p97, %p98
    %p100 = scmp.ne.s32.totalorder %s91, %s92
    %p101 = scmp.eq.s32.totalorder %s18, 0
    %p102 = por %p100, %p101
    %p103 = scmp.ne.s32.totalorder %s91, %s92
    %p104 = scmp.eq.s32.totalorder %s19, 3
    %p105 = por %p103, %p104
    %p107 = scmp.ne.s32.totalorder %s92, %s106
    %p108 = scmp.eq.s32.totalorder %s19, 0
    %p109 = por %p107, %p108
    %s111 = sadd.s32 %s110, 1
    %p114 = scmp.eq.s32.totalorder %s13, 3
    %p115 = scmp.ne.s32.totalorder %s110, %s112
    %p116 = scmp.eq.s32.totalorder %s13, 0
    %p117 = por %p115, %p116
    %p118 = scmp.ne.s32.totalorder %s110, %s112
    %p119 = scmp.eq.s32.totalorder %s18, 3
    %p120 = por %p118, %p119
    %p121 = scmp.ne.s32.totalorder %s112, %s113
    %p122 = scmp.eq.s32.totalorder %s18, 0
    %p123 = por %p121, %p122
    %p124 = scmp.ne.s32.totalorder %s112, %s113
    %p125 = scmp.eq.s32.totalorder %s19, 3
    %p126 = por %p124, %p125
    %p128 = scmp.ne.s32.totalorder %s113, %s127
    %p129 = scmp.eq.s32.totalorder %s19, 0
    %p130 = por %p128, %p129
    %s132 = sadd.s32 %s131, 1
    %p135 = scmp.eq.s32.totalorder %s13, 3
    %p136 = scmp.ne.s32.totalorder %s131, %s133
    %p137 = scmp.eq.s32.totalorder %s13, 0
    %p138 = por %p136, %p137
    %p139 = scmp.ne.s32.totalorder %s131, %s133
    %p140 = scmp.eq.s32.totalorder %s18, 3
    %p141 = por %p139, %p140
    %p142 = scmp.ne.s32.totalorder %s133, %s134
    %p143 = scmp.eq.s32.totalorder %s18, 0
    %p144 = por %p142, %p143
    %p145 = scmp.ne.s32.totalorder %s133, %s134
    %p146 = scmp.eq.s32.totalorder %s19, 3
    %p147 = por %p145, %p146
    %p149 = scmp.ne.s32.totalorder %s134, %s148
    %p150 = scmp.eq.s32.totalorder %s19, 0
    %p151 = por %p149, %p150
    %s153 = sadd.s32 %s152, 1
    %p156 = scmp.eq.s32.totalorder %s13, 3
    %p157 = scmp.ne.s32.totalorder %s152, %s154
    %p158 = scmp.eq.s32.totalorder %s13, 0
    %p159 = por %p157, %p158
    %p160 = scmp.ne.s32.totalorder %s152, %s154
    %p161 = scmp.eq.s32.totalorder %s18, 3
    %p162 = por %p160, %p161
    %p163 = scmp.ne.s32.totalorder %s154, %s155
    %p164 = scmp.eq.s32.totalorder %s18, 0
    %p165 = por %p163, %p164
    %p166 = scmp.ne.s32.totalorder %s154, %s155
    %p167 = scmp.eq.s32.totalorder %s19, 3
    %p168 = por %p166, %p167
    %p170 = scmp.ne.s32.totalorder %s155, %s169
    %p171 = scmp.eq.s32.totalorder %s19, 0
    %p172 = por %p170, %p171
    %s173 = ssub.s32 %s13, %s20
    %p174 = scmp.eq.s32.totalorder %s173, 0
    %s176 = sadd.s32 %s175, 1
    %s177 = scalar_select %p174, %s175, %s176
    %p180 = pneg %p174
    %p181 = scmp.eq.s32.totalorder %s13, 3
    %p182 = por %p180, %p181
    %p183 = scmp.ne.s32.totalorder %s175, %s178
    %p184 = scmp.eq.s32.totalorder %s13, 0
    %p185 = por %p183, %p184
    %p186 = scmp.ne.s32.totalorder %s175, %s178
    %p187 = scmp.eq.s32.totalorder %s18, 3
    %p188 = por %p186, %p187
    %p189 = scmp.ne.s32.totalorder %s178, %s179
    %p190 = scmp.eq.s32.totalorder %s18, 0
    %p191 = por %p189, %p190
    %p192 = scmp.ne.s32.totalorder %s178, %s179
    %p193 = scmp.eq.s32.totalorder %s19, 3
    %p194 = por %p192, %p193
    %p196 = scmp.ne.s32.totalorder %s179, %s195
    %p197 = scmp.eq.s32.totalorder %s19, 0
    %p198 = por %p196, %p197
    %p199 = scmp.le.s32.totalorder 1, %s13
    %p200 = scmp.lt.s32.totalorder %s13, 5
    %p201 = pnand %p199, %p200
    %p202 = pneg %p201
    // Predicated region
    $region9: #{tpu_custom_call.1} parent=5 // pred_check
      _
    $region10: #{tpu_custom_call.1} parent=5 // pred_check_branch
      %204 = sbr.rel (%p201) target = $region12
    $region11: #{tpu_custom_call.1} parent=5 // pred_region
      %s205 = ssub.s32 %s13, 1
      // Predicated region
      $region13: #{tpu_custom_call.1} parent=11 // pred_check
        %p206 = pneg %p60
      $region14: #{tpu_custom_call.1} parent=11 // pred_check_branch
        %208 = sbr.rel (%p206) target = $region16
      $region15: #{tpu_custom_call.1} parent=11 // pred_region
        _
      $region16: #{tpu_custom_call.1} parent=11 // pred_fallthru
        _
      // Predicated region
      $region17: #{tpu_custom_call.1} parent=11 // pred_check
        %p209 = pneg %p81
      $region18: #{tpu_custom_call.1} parent=11 // pred_check_branch
        %211 = sbr.rel (%p209) target = $region20
      $region19: #{tpu_custom_call.1} parent=11 // pred_region
        _
      $region20: #{tpu_custom_call.1} parent=11 // pred_fallthru
        _
      // Predicated region
      $region21: #{tpu_custom_call.1} parent=11 // pred_check
        %p212 = pneg %p102
      $region22: #{tpu_custom_call.1} parent=11 // pred_check_branch
        %214 = sbr.rel (%p212) target = $region24
      $region23: #{tpu_custom_call.1} parent=11 // pred_region
        _
      $region24: #{tpu_custom_call.1} parent=11 // pred_fallthru
        _
      // Predicated region
      $region25: #{tpu_custom_call.1} parent=11 // pred_check
        %p215 = pneg %p123
      $region26: #{tpu_custom_call.1} parent=11 // pred_check_branch
        %217 = sbr.rel (%p215) target = $region28
      $region27: #{tpu_custom_call.1} parent=11 // pred_region
        _
      $region28: #{tpu_custom_call.1} parent=11 // pred_fallthru
        _
      // Predicated region
      $region29: #{tpu_custom_call.1} parent=11 // pred_check
        %p218 = pneg %p144
      $region30: #{tpu_custom_call.1} parent=11 // pred_check_branch
        %220 = sbr.rel (%p218) target = $region32
      $region31: #{tpu_custom_call.1} parent=11 // pred_region
        _
      $region32: #{tpu_custom_call.1} parent=11 // pred_fallthru
        _
      // Predicated region
      $region33: #{tpu_custom_call.1} parent=11 // pred_check
        %p221 = pneg %p165
      $region34: #{tpu_custom_call.1} parent=11 // pred_check_branch
        %223 = sbr.rel (%p221) target = $region36
      $region35: #{tpu_custom_call.1} parent=11 // pred_region
        _
      $region36: #{tpu_custom_call.1} parent=11 // pred_fallthru
        _
    $region12: #{tpu_custom_call.1} parent=5 // pred_fallthru
      _
    %p224 = scmp.lt.s32.totalorder %s13, 4
    // Predicated region
    $region37: #{tpu_custom_call.1} parent=5 // pred_check
      %p225 = pneg %p224
    $region38: #{tpu_custom_call.1} parent=5 // pred_check_branch
      %227 = sbr.rel (%p225) target = $region40
    $region39: #{tpu_custom_call.1} parent=5 // pred_region
      // Predicated region
      $region41: #{tpu_custom_call.1} parent=39 // pred_check
        %p228 = pneg %p33
      $region42: #{tpu_custom_call.1} parent=39 // pred_check_branch
        %230 = sbr.rel (%p228) target = $region44
      $region43: #{tpu_custom_call.1} parent=39 // pred_region
        %s231 = smul.u32 8, %s13
        %p232 = scmp.lt.s32.totalorder %s231, 31
        %s233 = scalar_select %p232, %s231, 31
        %s234 = smul.addr %s233, 8
        %s235 = scalar_lea.vmem %s0, %s234
        %s236 = smul.u32 8, %s13
      $region44: #{tpu_custom_call.1} parent=39 // pred_fallthru
        _
    $region40: #{tpu_custom_call.1} parent=5 // pred_fallthru
      _
    %p237 = scmp.le.s32.totalorder 1, %s13
    %p238 = scmp.lt.s32.totalorder %s13, 5
    %p239 = pnand %p237, %p238
    %p240 = pneg %p239
    // Predicated region
    $region45: #{tpu_custom_call.1} parent=5 // pred_check
      _
    $region46: #{tpu_custom_call.1} parent=5 // pred_check_branch
      %242 = sbr.rel (%p239) target = $region48
    $region47: #{tpu_custom_call.1} parent=5 // pred_region
      %s243 = ssub.s32 %s13, 1
      %s244 = smul.u32 8, %s18
      %p245 = scmp.lt.s32.totalorder %s244, 31
      %s246 = scalar_select %p245, %s244, 31
      %s247 = smul.addr %s246, 8
      %s248 = scalar_lea.vmem %s0, %s247
      %p249 = pneg %p39
      %p250 = pneg %p36
      %p251 = pneg %p60
      %p252 = pneg %p57
      %p253 = pneg %p81
      %p254 = pneg %p78
      %p255 = pneg %p102
      %p256 = pneg %p99
      %p257 = pneg %p123
      %p258 = pneg %p120
      %p259 = pneg %p144
      %p260 = pneg %p141
      %p261 = pneg %p165
      %p262 = pneg %p162
      %p263 = pneg %p191
      %p264 = pneg %p188
      %s265 = smul.u32 8, %s18
      %p266 = scmp.lt.s32.totalorder %s265, 31
      %s267 = scalar_select %p266, %s265, 31
      %s268 = smul.addr %s267, 8
      %s269 = scalar_lea.vmem %s7, %s268
      %s270 = smul.u32 8, %s18
      %p271 = scmp.lt.s32.totalorder %s270, 31
      %s272 = scalar_select %p271, %s270, 31
      %s273 = smul.addr %s272, 8
      %s274 = scalar_lea.vmem %s0, %s273
      %s275 = smul.u32 8, %s18
      %s276 = smul.u32 8, %s18
      %p277 = scmp.lt.s32.totalorder %s276, 31
      %s278 = scalar_select %p277, %s276, 31
      %s279 = smul.addr %s278, 8
      %s280 = scalar_lea.vmem %s7, %s279
      %s281 = smul.u32 8, %s18
      %v283 = vld [vmem:[%s274] sm:$0xff]
      %v284 = vld [vmem:[%s274 + $0x8] sm:$0xff]
      %v285 = vld [vmem:[%s274 + $0x10] sm:$0xff]
      %v286 = vld [vmem:[%s274 + $0x18] sm:$0xff]
      %v287 = vld [vmem:[%s274 + $0x20] sm:$0xff]
      %v288 = vld [vmem:[%s274 + $0x28] sm:$0xff]
      %v289 = vld [vmem:[%s274 + $0x30] sm:$0xff]
      %v290 = vld [vmem:[%s274 + $0x38] sm:$0xff]
      %v291 = vpack.c.bf16 %v284, %v283
      %v292 = vpack.c.bf16 %v286, %v285
      %v293 = vpack.c.bf16 %v288, %v287
      %v294 = vpack.c.bf16 %v290, %v289
      %v295 = vld [vmem:[%s1] sm:$0xf]
      %v296 = vld [vmem:[%s1 + $0x4] sm:$0xf]
      %v297 = vld [vmem:[%s1 + $0x8] sm:$0xf]
      %v298 = vld [vmem:[%s1 + $0xc] sm:$0xf]
      %v299 = vld [vmem:[%s2] sm:$0x1]
      %v301 = vlaneseq
      %v302 = vshrl.u32 %v301, 7
      %v303 = vsub.s32 0, %v302
      %v304 = vrot.slane %v299, %v303
      %v310 = vunpack.c.l.b16 %v295
      %v311 = vunpack.c.l.b16 %v296
      %v312 = vunpack.c.l.b16 %v297
      %v313 = vunpack.c.l.b16 %v298
      %v314 = vpack.c.b16 %v311, %v310
      %v315 = vpack.c.b16 %v313, %v312
      %vm318 = vcmask 261120
      %v320 = vsel %vm318, %v291, 0
      %v323 = vsel %vm318, %v292, 0
      %v326 = vsel %vm318, %v293, 0
      %v329 = vsel %vm318, %v294, 0
      %331 = vmatprep.subr.bf16.mxu0 0
      %332 = vmatpush1.bf16.msra.mxu0 %v314
      %333 = vmatprep.subr.bf16.mxu0 0
      %334 = vmatpush1.bf16.msra.mxu0 %v315
      %335 = vmatprep.subr.bf16.mxu0 0
      %336 = vmatpush1.bf16.msra.mxu0 0
      %337 = vmatprep.subr.bf16.mxu0 0
      %338 = vmatpush1.bf16.msra.mxu0 0
      %339 = vmatprep.subr.bf16.mxu0 0
      %340 = vmatpush1.bf16.msra.mxu0 0
      %341 = vmatprep.subr.bf16.mxu0 0
      %342 = vmatpush1.bf16.msra.mxu0 0
      %343 = vmatprep.subr.bf16.mxu0 0
      %344 = vmatpush1.bf16.msra.mxu0 0
      %345 = vmatprep.subr.bf16.mxu0 0
      %346 = vmatpush1.bf16.msra.mxu0 0
      %347 = vmatprep.subr.bf16.mxu0 0
      %348 = vmatpush1.bf16.msra.mxu0 0
      %349 = vmatprep.subr.bf16.mxu0 0
      %350 = vmatpush1.bf16.msra.mxu0 0
      %351 = vmatprep.subr.bf16.mxu0 0
      %352 = vmatpush1.bf16.msra.mxu0 0
      %353 = vmatprep.subr.bf16.mxu0 0
      %354 = vmatpush1.bf16.msra.mxu0 0
      %355 = vmatprep.subr.bf16.mxu0 0
      %356 = vmatpush1.bf16.msra.mxu0 0
      %357 = vmatprep.subr.bf16.mxu0 0
      %358 = vmatpush1.bf16.msra.mxu0 0
      %359 = vmatprep.subr.bf16.mxu0 0
      %360 = vmatpush1.bf16.msra.mxu0 0
      %361 = vmatprep.subr.bf16.mxu0 0
      %362 = vmatpush1.bf16.msra.mxu0 0
      %363 = vmatprep.mubr.bf16.mxu0 0
      %364 = vmatmul.mubr.bf16.gmra.mrb[0].mxu0 %v320
      %v365 = vpop.f32.mrb[0].mxu0
      %v366 = vadd.f32 %v304, %v365
      %v367 = vpop.f32.mrb[0].mxu0
      %v368 = vpop.f32.mrb[0].mxu0
      %v369 = vadd.f32 %v304, %v368
      %v370 = vpop.f32.mrb[0].mxu0
      %371 = vmatprep.mubr.bf16.mxu0 0
      %372 = vmatmul.mubr.bf16.gmra.mrb[0].mxu0 %v323
      %v373 = vpop.f32.mrb[0].mxu0
      %v374 = vadd.f32 %v304, %v373
      %v375 = vpop.f32.mrb[0].mxu0
      %v376 = vpop.f32.mrb[0].mxu0
      %v377 = vadd.f32 %v304, %v376
      %v378 = vpop.f32.mrb[0].mxu0
      %379 = vmatprep.mubr.bf16.mxu0 0
      %380 = vmatmul.mubr.bf16.gmra.mrb[0].mxu0 %v326
      %v381 = vpop.f32.mrb[0].mxu0
      %v382 = vadd.f32 %v304, %v381
      %v383 = vpop.f32.mrb[0].mxu0
      %v384 = vpop.f32.mrb[0].mxu0
      %v385 = vadd.f32 %v304, %v384
      %v386 = vpop.f32.mrb[0].mxu0
      %387 = vmatprep.mubr.bf16.mxu0 0
      %388 = vmatmul.mubr.bf16.gmra.mrb[0].mxu0 %v329
      %v389 = vpop.f32.mrb[0].mxu0
      %v390 = vadd.f32 %v304, %v389
      %v391 = vpop.f32.mrb[0].mxu0
      %v392 = vpop.f32.mrb[0].mxu0
      %v393 = vadd.f32 %v304, %v392
      %v394 = vpop.f32.mrb[0].mxu0
      %395 = vdwg.mxu0
      %v396 = vmax.f32 %v366, 0.0
      %v397 = vmax.f32 %v369, 0.0
      %v398 = vmax.f32 %v374, 0.0
      %v399 = vmax.f32 %v377, 0.0
      %v400 = vmax.f32 %v382, 0.0
      %v401 = vmax.f32 %v385, 0.0
      %v402 = vmax.f32 %v390, 0.0
      %v403 = vmax.f32 %v393, 0.0
      %v404 = vpack.c.bf16 %v397, %v396
      %v405 = vpack.c.bf16 %v399, %v398
      %v406 = vpack.c.bf16 %v401, %v400
      %v407 = vpack.c.bf16 %v403, %v402
      %v408 = vld [vmem:[%s3] sm:$0xf]
      %v409 = vld [vmem:[%s3 + $0x4] sm:$0xf]
      %v410 = vld [vmem:[%s3 + $0x8] sm:$0xf]
      %v411 = vld [vmem:[%s3 + $0xc] sm:$0xf]
      %v412 = vld [vmem:[%s3 + $0x10] sm:$0xf]
      %v413 = vld [vmem:[%s3 + $0x14] sm:$0xf]
      %v414 = vld [vmem:[%s3 + $0x18] sm:$0xf]
      %v415 = vld [vmem:[%s3 + $0x1c] sm:$0xf]
      %v416 = vld [vmem:[%s4] sm:$0x1]
      %v418 = vlaneseq
      %v419 = vshrl.u32 %v418, 7
      %v420 = vsub.s32 0, %v419
      %v421 = vrot.slane %v416, %v420
      %v431 = vunpack.c.l.b16 %v408
      %v432 = vunpack.c.l.b16 %v409
      %v433 = vunpack.c.l.b16 %v410
      %v434 = vunpack.c.l.b16 %v411
      %v435 = vunpack.c.l.b16 %v412
      %v436 = vunpack.c.l.b16 %v413
      %v437 = vunpack.c.l.b16 %v414
      %v438 = vunpack.c.l.b16 %v415
      %v439 = vpack.c.b16 %v432, %v431
      %v440 = vpack.c.b16 %v434, %v433
      %v441 = vpack.c.b16 %v436, %v435
      %v442 = vpack.c.b16 %v438, %v437
      %vm447 = vcmask 523264
      %v449 = vsel %vm447, %v404, 0
      %v452 = vsel %vm447, %v405, 0
      %v455 = vsel %vm447, %v406, 0
      %v458 = vsel %vm447, %v407, 0
      %460 = vmatprep.subr.bf16.mxu0 0
      %461 = vmatpush1.bf16.msra.mxu0 %v439
      %462 = vmatprep.subr.bf16.mxu0 0
      %463 = vmatpush1.bf16.msra.mxu0 %v440
      %464 = vmatprep.subr.bf16.mxu0 0
      %465 = vmatpush1.bf16.msra.mxu0 %v441
      %466 = vmatprep.subr.bf16.mxu0 0
      %467 = vmatpush1.bf16.msra.mxu0 %v442
      %468 = vmatprep.subr.bf16.mxu0 0
      %469 = vmatpush1.bf16.msra.mxu0 0
      %470 = vmatprep.subr.bf16.mxu0 0
      %471 = vmatpush1.bf16.msra.mxu0 0
      %472 = vmatprep.subr.bf16.mxu0 0
      %473 = vmatpush1.bf16.msra.mxu0 0
      %474 = vmatprep.subr.bf16.mxu0 0
      %475 = vmatpush1.bf16.msra.mxu0 0
      %476 = vmatprep.subr.bf16.mxu0 0
      %477 = vmatpush1.bf16.msra.mxu0 0
      %478 = vmatprep.subr.bf16.mxu0 0
      %479 = vmatpush1.bf16.msra.mxu0 0
      %480 = vmatprep.subr.bf16.mxu0 0
      %481 = vmatpush1.bf16.msra.mxu0 0
      %482 = vmatprep.subr.bf16.mxu0 0
      %483 = vmatpush1.bf16.msra.mxu0 0
      %484 = vmatprep.subr.bf16.mxu0 0
      %485 = vmatpush1.bf16.msra.mxu0 0
      %486 = vmatprep.subr.bf16.mxu0 0
      %487 = vmatpush1.bf16.msra.mxu0 0
      %488 = vmatprep.subr.bf16.mxu0 0
      %489 = vmatpush1.bf16.msra.mxu0 0
      %490 = vmatprep.subr.bf16.mxu0 0
      %491 = vmatpush1.bf16.msra.mxu0 0
      %492 = vmatprep.mubr.bf16.mxu0 0
      %493 = vmatmul.mubr.bf16.gmra.mrb[0].mxu0 %v449
      %v494 = vpop.f32.mrb[0].mxu0
      %v495 = vadd.f32 %v421, %v494
      %v496 = vpop.f32.mrb[0].mxu0
      %v497 = vpop.f32.mrb[0].mxu0
      %v498 = vadd.f32 %v421, %v497
      %v499 = vpop.f32.mrb[0].mxu0
      %500 = vmatprep.mubr.bf16.mxu0 0
      %501 = vmatmul.mubr.bf16.gmra.mrb[0].mxu0 %v452
      %v502 = vpop.f32.mrb[0].mxu0
      %v503 = vadd.f32 %v421, %v502
      %v504 = vpop.f32.mrb[0].mxu0
      %v505 = vpop.f32.mrb[0].mxu0
      %v506 = vadd.f32 %v421, %v505
      %v507 = vpop.f32.mrb[0].mxu0
      %508 = vmatprep.mubr.bf16.mxu0 0
      %509 = vmatmul.mubr.bf16.gmra.mrb[0].mxu0 %v455
      %v510 = vpop.f32.mrb[0].mxu0
      %v511 = vadd.f32 %v421, %v510
      %v512 = vpop.f32.mrb[0].mxu0
      %v513 = vpop.f32.mrb[0].mxu0
      %v514 = vadd.f32 %v421, %v513
      %v515 = vpop.f32.mrb[0].mxu0
      %516 = vmatprep.mubr.bf16.mxu0 0
      %517 = vmatmul.mubr.bf16.gmra.mrb[0].mxu0 %v458
      %v518 = vpop.f32.mrb[0].mxu0
      %v519 = vadd.f32 %v421, %v518
      %v520 = vpop.f32.mrb[0].mxu0
      %v521 = vpop.f32.mrb[0].mxu0
      %v522 = vadd.f32 %v421, %v521
      %v523 = vpop.f32.mrb[0].mxu0
      %524 = vdwg.mxu0
      %v525 = vmax.f32 %v495, 0.0
      %v526 = vmax.f32 %v498, 0.0
      %v527 = vmax.f32 %v503, 0.0
      %v528 = vmax.f32 %v506, 0.0
      %v529 = vmax.f32 %v511, 0.0
      %v530 = vmax.f32 %v514, 0.0
      %v531 = vmax.f32 %v519, 0.0
      %v532 = vmax.f32 %v522, 0.0
      %v533 = vpack.c.bf16 %v526, %v525
      %v534 = vpack.c.bf16 %v528, %v527
      %v535 = vpack.c.bf16 %v530, %v529
      %v536 = vpack.c.bf16 %v532, %v531
      %v537 = vld [vmem:[%s5] sm:$0xf]
      %v538 = vld [vmem:[%s5 + $0x4] sm:$0xf]
      %v539 = vld [vmem:[%s5 + $0x8] sm:$0xf]
      %v540 = vld [vmem:[%s5 + $0xc] sm:$0xf]
      %v541 = vld [vmem:[%s5 + $0x10] sm:$0xf]
      %v542 = vld [vmem:[%s5 + $0x14] sm:$0xf]
      %v543 = vld [vmem:[%s5 + $0x18] sm:$0xf]
      %v544 = vld [vmem:[%s5 + $0x1c] sm:$0xf]
      %v545 = vld [vmem:[%s6] sm:$0x1]
      %v547 = vlaneseq
      %v548 = vshrl.u32 %v547, 7
      %v549 = vsub.s32 0, %v548
      %v550 = vrot.slane %v545, %v549
      %v560 = vunpack.c.l.b16 %v537
      %v561 = vunpack.c.l.b16 %v538
      %v562 = vunpack.c.l.b16 %v539
      %v563 = vunpack.c.l.b16 %v540
      %v564 = vunpack.c.l.b16 %v541
      %v565 = vunpack.c.l.b16 %v542
      %v566 = vunpack.c.l.b16 %v543
      %v567 = vunpack.c.l.b16 %v544
      %v568 = vpack.c.b16 %v561, %v560
      %v569 = vpack.c.b16 %v563, %v562
      %v570 = vpack.c.b16 %v565, %v564
      %v571 = vpack.c.b16 %v567, %v566
      %v577 = vsel %vm447, %v533, 0
      %v580 = vsel %vm447, %v534, 0
      %v583 = vsel %vm447, %v535, 0
      %v586 = vsel %vm447, %v536, 0
      %588 = vmatprep.subr.bf16.mxu0 0
      %589 = vmatpush1.bf16.msra.mxu0 %v568
      %590 = vmatprep.subr.bf16.mxu0 0
      %591 = vmatpush1.bf16.msra.mxu0 %v569
      %592 = vmatprep.subr.bf16.mxu0 0
      %593 = vmatpush1.bf16.msra.mxu0 %v570
      %594 = vmatprep.subr.bf16.mxu0 0
      %595 = vmatpush1.bf16.msra.mxu0 %v571
      %596 = vmatprep.subr.bf16.mxu0 0
      %597 = vmatpush1.bf16.msra.mxu0 0
      %598 = vmatprep.subr.bf16.mxu0 0
      %599 = vmatpush1.bf16.msra.mxu0 0
      %600 = vmatprep.subr.bf16.mxu0 0
      %601 = vmatpush1.bf16.msra.mxu0 0
      %602 = vmatprep.subr.bf16.mxu0 0
      %603 = vmatpush1.bf16.msra.mxu0 0
      %604 = vmatprep.subr.bf16.mxu0 0
      %605 = vmatpush1.bf16.msra.mxu0 0
      %606 = vmatprep.subr.bf16.mxu0 0
      %607 = vmatpush1.bf16.msra.mxu0 0
      %608 = vmatprep.subr.bf16.mxu0 0
      %609 = vmatpush1.bf16.msra.mxu0 0
      %610 = vmatprep.subr.bf16.mxu0 0
      %611 = vmatpush1.bf16.msra.mxu0 0
      %612 = vmatprep.subr.bf16.mxu0 0
      %613 = vmatpush1.bf16.msra.mxu0 0
      %614 = vmatprep.subr.bf16.mxu0 0
      %615 = vmatpush1.bf16.msra.mxu0 0
      %616 = vmatprep.subr.bf16.mxu0 0
      %617 = vmatpush1.bf16.msra.mxu0 0
      %618 = vmatprep.subr.bf16.mxu0 0
      %619 = vmatpush1.bf16.msra.mxu0 0
      %620 = vmatprep.mubr.bf16.mxu0 0
      %621 = vmatmul.mubr.bf16.gmra.mrb[0].mxu0 %v577
      %v622 = vpop.f32.mrb[0].mxu0
      %v623 = vadd.f32 %v550, %v622
      %v624 = vpop.f32.mrb[0].mxu0
      %v625 = vpop.f32.mrb[0].mxu0
      %v626 = vadd.f32 %v550, %v625
      %v627 = vpop.f32.mrb[0].mxu0
      %628 = vmatprep.mubr.bf16.mxu0 0
      %629 = vmatmul.mubr.bf16.gmra.mrb[0].mxu0 %v580
      %v630 = vpop.f32.mrb[0].mxu0
      %v631 = vadd.f32 %v550, %v630
      %v632 = vpop.f32.mrb[0].mxu0
      %v633 = vpop.f32.mrb[0].mxu0
      %v634 = vadd.f32 %v550, %v633
      %v635 = vpop.f32.mrb[0].mxu0
      %636 = vmatprep.mubr.bf16.mxu0 0
      %637 = vmatmul.mubr.bf16.gmra.mrb[0].mxu0 %v583
      %v638 = vpop.f32.mrb[0].mxu0
      %v639 = vadd.f32 %v550, %v638
      %v640 = vpop.f32.mrb[0].mxu0
      %v641 = vpop.f32.mrb[0].mxu0
      %v642 = vadd.f32 %v550, %v641
      %v643 = vpop.f32.mrb[0].mxu0
      %644 = vmatprep.mubr.bf16.mxu0 0
      %645 = vmatmul.mubr.bf16.gmra.mrb[0].mxu0 %v586
      %v646 = vpop.f32.mrb[0].mxu0
      %v647 = vadd.f32 %v550, %v646
      %v648 = vpop.f32.mrb[0].mxu0
      %v649 = vpop.f32.mrb[0].mxu0
      %v650 = vadd.f32 %v550, %v649
      %v651 = vpop.f32.mrb[0].mxu0
      %652 = vdwg.mxu0
      %vm653 = vcmask 64512
      %654 = vst.msk [vmem:[%s280] sm:$0xff] %vm653, %v623
      %655 = vst.msk [vmem:[%s280 + $0x8] sm:$0xff] %vm653, %v626
      %656 = vst.msk [vmem:[%s280 + $0x10] sm:$0xff] %vm653, %v631
      %657 = vst.msk [vmem:[%s280 + $0x18] sm:$0xff] %vm653, %v634
      %658 = vst.msk [vmem:[%s280 + $0x20] sm:$0xff] %vm653, %v639
      %659 = vst.msk [vmem:[%s280 + $0x28] sm:$0xff] %vm653, %v642
      %660 = vst.msk [vmem:[%s280 + $0x30] sm:$0xff] %vm653, %v647
      %661 = vst.msk [vmem:[%s280 + $0x38] sm:$0xff] %vm653, %v650
      %s662 = smul.u32 8, %s18
      %p663 = scmp.lt.s32.totalorder %s662, 31
      %s664 = scalar_select %p663, %s662, 31
      %s665 = smul.addr %s664, 8
      %s666 = scalar_lea.vmem %s7, %s665
      // Predicated region
      $region49: #{tpu_custom_call.1} parent=47 // pred_check
        %p667 = pneg %p188
      $region50: #{tpu_custom_call.1} parent=47 // pred_check_branch
        %669 = sbr.rel (%p667) target = $region52
      $region51: #{tpu_custom_call.1} parent=47 // pred_region
        %s670 = smul.u32 8, %s18
      $region52: #{tpu_custom_call.1} parent=47 // pred_fallthru
        _
    $region48: #{tpu_custom_call.1} parent=5 // pred_fallthru
      _
    %p671 = scmp.le.s32.totalorder 2, %s13
    // Predicated region
    $region53: #{tpu_custom_call.1} parent=5 // pred_check
      %p672 = pneg %p671
    $region54: #{tpu_custom_call.1} parent=5 // pred_check_branch
      %674 = sbr.rel (%p672) target = $region56
    $region55: #{tpu_custom_call.1} parent=5 // pred_region
      %s675 = ssub.s32 %s13, 2
      // Predicated region
      $region57: #{tpu_custom_call.1} parent=55 // pred_check
        %p676 = pneg %p194
      $region58: #{tpu_custom_call.1} parent=55 // pred_check_branch
        %678 = sbr.rel (%p676) target = $region60
      $region59: #{tpu_custom_call.1} parent=55 // pred_region
        %s679 = smul.u32 8, %s19
        %p680 = scmp.lt.s32.totalorder %s679, 31
        %s681 = scalar_select %p680, %s679, 31
        %s682 = smul.addr %s681, 8
        %s683 = scalar_lea.vmem %s7, %s682
      $region60: #{tpu_custom_call.1} parent=55 // pred_fallthru
        _
    $region56: #{tpu_custom_call.1} parent=5 // pred_fallthru
      _
  $region6: #{tpu_custom_call.1} parent=0 // loop_footer
    %s17 = sadd.s32 1, %s13
  $region7: #{tpu_custom_call.1} parent=0 // loop_footer_branch
    %12 = sbr.rel target = $region3
  $region8: #{tpu_custom_call.1} parent=0 // loop_exit
    _

</llo_original>
